<compile_context>
chip_gen: v7x
topology: tpu7x:2x2x1
jax: 0.10.0
libtpu: 0.0.40
codegen_flags: <defaults>
</compile_context>

<pallas_src>
import functools

import jax
import jax.numpy as jnp
from jax import lax
from jax.experimental import pallas as pl
from jax.experimental.pallas import tpu as pltpu

_MASK_VALUE = -1e30  # finite "minus infinity": fully-masked tiles can never NaN


def _round_up(x, m):
    return ((x + m - 1) // m) * m


def _divisor_tile(sp, pref):
    """Largest multiple of 128 <= pref that divides sp (sp is a multiple of 128)."""
    t = max(128, (min(pref, sp) // 128) * 128)
    while sp % t:
        t -= 128
    return t


def _vmem_limit_bytes():
    """Per-chip scoped-VMEM budget with ~15% headroom for compiler scratch."""
    try:
        cap = int(pltpu.get_tpu_info().vmem_capacity_bytes)
    except Exception:  # info unavailable -> assume the smallest (v7x: 64 MiB/TC)
        cap = 64 * 1024 * 1024
    return max(32 * 1024 * 1024, int(cap * 0.85))


# ----------------------------------------------------------------------------
# Kernels
# ----------------------------------------------------------------------------
def fused_attn_kernel(x_ref, wq_ref, wk_ref, wv_ref, bq_ref, bk_ref, bv_ref,
                      o_ref, *, kv_real, kv_padded):
    """Whole-problem attention in VMEM (small S*H).

    Weights are pre-transposed ([in, out]) and lane-padded; 1/sqrt(H) is folded
    into wq/bq.  MXU operands use x's dtype (bf16 fast path); accum stays f32.
    """
    x = x_ref[...]
    cd = x.dtype
    q = jnp.dot(x, wq_ref[...], preferred_element_type=jnp.float32) + bq_ref[...]
    k = jnp.dot(x, wk_ref[...], preferred_element_type=jnp.float32) + bk_ref[...]
    v = jnp.dot(x, wv_ref[...], preferred_element_type=jnp.float32) + bv_ref[...]
    # Scores: contract the last dims directly (no k.T relayout through the XLU).
    s = lax.dot_general(q.astype(cd), k.astype(cd), (((1,), (1,)), ((), ())),
                        preferred_element_type=jnp.float32)  # [Sp, Sp] f32
    if kv_padded:  # static branch: only emitted when the key axis was padded
        key_ids = lax.broadcasted_iota(jnp.int32, s.shape, 1)
        s = jnp.where(key_ids < kv_real, s, _MASK_VALUE)
    m = jnp.max(s, axis=-1, keepdims=True)
    p = jnp.exp(s - m)
    l = jnp.sum(p, axis=-1, keepdims=True)
    out = lax.dot_general(p.astype(cd), v.astype(cd), (((1,), (0,)), ((), ())),
                          preferred_element_type=jnp.float32)
    o_ref[...] = (out / l).astype(o_ref.dtype)


def kv_proj_kernel(x_ref, wk_ref, wv_ref, bk_ref, bv_ref, k_ref, v_ref):
    """K / V projections written as two separate lane-aligned output slabs."""
    x = x_ref[...]
    k_ref[...] = (jnp.dot(x, wk_ref[...], preferred_element_type=jnp.float32)
                  + bk_ref[...]).astype(k_ref.dtype)
    v_ref[...] = (jnp.dot(x, wv_ref[...], preferred_element_type=jnp.float32)
                  + bv_ref[...]).astype(v_ref.dtype)


def flash_attn_kernel(x_ref, wq_ref, bq_ref, k_ref, v_ref, o_ref,
                      q_sc, m_sc, l_sc, acc_sc, *, kv_real, kv_padded, block_k):
    """Online-softmax attention with the Q projection fused in.

    kv (reduction) axis is the innermost ('arbitrary') grid axis; the projected
    q tile plus f32 running max / sum / accumulator persist in VMEM scratch.
    """
    ki = pl.program_id(1)

    @pl.when(ki == 0)
    def _init():
        # Project q once per q-tile (scale and bias already folded into wq/bq),
        # so Q never round-trips HBM.
        q = jnp.dot(x_ref[...], wq_ref[...],
                    preferred_element_type=jnp.float32) + bq_ref[...]
        q_sc[...] = q.astype(q_sc.dtype)
        m_sc[...] = jnp.full_like(m_sc, -jnp.inf)
        l_sc[...] = jnp.zeros_like(l_sc)
        acc_sc[...] = jnp.zeros_like(acc_sc)

    # Scores: contract the last dims directly (no k.T relayout through the XLU).
    s = lax.dot_general(q_sc[...], k_ref[...], (((1,), (1,)), ((), ())),
                        preferred_element_type=jnp.float32)  # [tq, tk] f32
    if kv_padded:  # static branch: mask padded key columns
        key_ids = ki * block_k + lax.broadcasted_iota(jnp.int32, s.shape, 1)
        s = jnp.where(key_ids < kv_real, s, _MASK_VALUE)

    m_prev = m_sc[...]
    m_new = jnp.maximum(m_prev, jnp.max(s, axis=-1, keepdims=True))
    alpha = jnp.exp(m_prev - m_new)
    # exp in the compute dtype (bf16 on v6e/v7x): p feeds the MXU directly with
    # no extra [tq, tk] VPU cast; the row-sum still accumulates in f32.
    p = jnp.exp((s - m_new).astype(v_ref.dtype))
    l_sc[...] = alpha * l_sc[...] + jnp.sum(p, axis=-1, keepdims=True,
                                            dtype=jnp.float32)
    acc_sc[...] = alpha * acc_sc[...] + jnp.dot(
        p, v_ref[...], preferred_element_type=jnp.float32)
    m_sc[...] = m_new

    @pl.when(ki == pl.num_programs(1) - 1)
    def _finalize():
        inv_l = pl.reciprocal(l_sc[...], approx=True)  # EUP slot, effectively free
        o_ref[...] = (acc_sc[...] * inv_l).astype(o_ref.dtype)


# ----------------------------------------------------------------------------
# Wrapper
# ----------------------------------------------------------------------------
def self_attention(x, wq, bq, wk, bk, wv, bv, *,
                   compute_dtype=jnp.bfloat16, tq=512, tk=512,
                   out_dtype=None, force_flash=False):
    """x: [S, H]; wq/wk/wv: PyTorch layout [out, in]; bq/bk/bv: [H]."""
    S, H = x.shape
    out_dtype = x.dtype if out_dtype is None else out_dtype
    scale = 1.0 / float(H) ** 0.5
    Hp = _round_up(H, 128)          # lane-dense width (unmasked stores)
    vmem_limit = _vmem_limit_bytes()

    def pad_w(a):  # [H, H] -> [Hp, Hp]
        return jnp.pad(a, ((0, Hp - a.shape[0]), (0, Hp - a.shape[1])))

    def pad_b(b):  # [H] -> [1, Hp] f32
        return jnp.pad(b, (0, Hp - b.shape[0])).reshape(1, Hp).astype(jnp.float32)

    # PyTorch Linear is x @ W^T; pre-transpose and fold 1/sqrt(H) into Wq / bq.
    wq_p = pad_w(wq.T * scale).astype(compute_dtype)
    wk_p = pad_w(wk.T).astype(compute_dtype)
    wv_p = pad_w(wv.T).astype(compute_dtype)
    bq_p = pad_b(bq * scale)
    bk_p = pad_b(bk)
    bv_p = pad_b(bv)

    # ------------- fused single-kernel path (small problems) -------------
    Sp_f = _round_up(S, 8)
    itemsize = jnp.dtype(compute_dtype).itemsize
    fused_bytes = (4 * Sp_f * Sp_f            # f32 score matrix
                   + 5 * 4 * Sp_f * Hp        # x/q/k/v/out (f32 upper bound)
                   + 3 * itemsize * Hp * Hp)  # weight blocks
    if not force_flash and fused_bytes <= (8 << 20):
        x_p = jnp.pad(x, ((0, Sp_f - S), (0, Hp - H))).astype(compute_dtype)
        out_p = pl.pallas_call(
            functools.partial(fused_attn_kernel, kv_real=S,
                              kv_padded=Sp_f > S),
            out_shape=jax.ShapeDtypeStruct((Sp_f, Hp), out_dtype),
            grid_spec=pltpu.PrefetchScalarGridSpec(
                num_scalar_prefetch=0,
                grid=(1,),
                in_specs=[pl.BlockSpec((Sp_f, Hp), lambda i: (0, 0)),
                          pl.BlockSpec((Hp, Hp), lambda i: (0, 0)),
                          pl.BlockSpec((Hp, Hp), lambda i: (0, 0)),
                          pl.BlockSpec((Hp, Hp), lambda i: (0, 0)),
                          pl.BlockSpec((1, Hp), lambda i: (0, 0)),
                          pl.BlockSpec((1, Hp), lambda i: (0, 0)),
                          pl.BlockSpec((1, Hp), lambda i: (0, 0))],
                out_specs=pl.BlockSpec((Sp_f, Hp), lambda i: (0, 0)),
            ),
            compiler_params=pltpu.CompilerParams(
                dimension_semantics=("arbitrary",),
                vmem_limit_bytes=vmem_limit),
        )(x_p, wq_p, wk_p, wv_p, bq_p, bk_p, bv_p)
        return out_p[:S, :H]

    # ------------------- tiled flash path (larger problems) -------------------
    Sp = _round_up(S, 128)
    tq_ = _divisor_tile(Sp, tq)
    tk_ = _divisor_tile(Sp, tk)
    # Give both v7x TensorCores a q tile when the sequence fits a single one.
    if Sp // tq_ == 1 and Sp >= 256:
        tq_ = _divisor_tile(Sp, Sp // 2)
    x_p = jnp.pad(x, ((0, Sp - S), (0, Hp - H))).astype(compute_dtype)

    # (a) K/V projection: two separate lane-aligned output slabs (no 3H slicing).
    k_arr, v_arr = pl.pallas_call(
        kv_proj_kernel,
        out_shape=[jax.ShapeDtypeStruct((Sp, Hp), compute_dtype)] * 2,
        grid_spec=pltpu.PrefetchScalarGridSpec(
            num_scalar_prefetch=0,
            grid=(Sp // tq_,),
            in_specs=[pl.BlockSpec((tq_, Hp), lambda i: (i, 0)),
                      pl.BlockSpec((Hp, Hp), lambda i: (0, 0)),
                      pl.BlockSpec((Hp, Hp), lambda i: (0, 0)),
                      pl.BlockSpec((1, Hp), lambda i: (0, 0)),
                      pl.BlockSpec((1, Hp), lambda i: (0, 0))],
            out_specs=[pl.BlockSpec((tq_, Hp), lambda i: (i, 0))] * 2,
        ),
        compiler_params=pltpu.CompilerParams(
            dimension_semantics=("parallel",),
            vmem_limit_bytes=vmem_limit),
    )(x_p, wk_p, wv_p, bk_p, bv_p)

    # (b) Flash attention with the Q projection fused in (Q never hits HBM).
    # TODO(synk): sweep pipeline_mode=pl.Buffered(1/3) on the invariant-weight
    # and k/v specs once measured on hardware; left at the default depth here.
    out_p = pl.pallas_call(
        functools.partial(flash_attn_kernel, kv_real=S, kv_padded=Sp > S,
                          block_k=tk_),
        out_shape=jax.ShapeDtypeStruct((Sp, Hp), out_dtype),
        grid_spec=pltpu.PrefetchScalarGridSpec(
            num_scalar_prefetch=0,
            grid=(Sp // tq_, Sp // tk_),   # kv (reduction) axis innermost
            in_specs=[pl.BlockSpec((tq_, Hp), lambda qi, ki: (qi, 0)),   # x rows
                      pl.BlockSpec((Hp, Hp), lambda qi, ki: (0, 0)),     # Wq^T*s
                      pl.BlockSpec((1, Hp), lambda qi, ki: (0, 0)),      # bq*s
                      pl.BlockSpec((tk_, Hp), lambda qi, ki: (ki, 0)),   # K
                      pl.BlockSpec((tk_, Hp), lambda qi, ki: (ki, 0))],  # V
            out_specs=pl.BlockSpec((tq_, Hp), lambda qi, ki: (qi, 0)),
            scratch_shapes=[pltpu.VMEM((tq_, Hp), compute_dtype),   # projected q
                            pltpu.VMEM((tq_, 1), jnp.float32),      # running max
                            pltpu.VMEM((tq_, 1), jnp.float32),      # running sum
                            pltpu.VMEM((tq_, Hp), jnp.float32)],    # accumulator
        ),
        compiler_params=pltpu.CompilerParams(
            dimension_semantics=("parallel", "arbitrary"),
            vmem_limit_bytes=vmem_limit),
    )(x_p, wq_p, bq_p, k_arr, v_arr)
    return out_p[:S, :H]


# ----------------------------------------------------------------------------
# Reference & test
# ----------------------------------------------------------------------------
def _reference(x, wq, bq, wk, bk, wv, bv):
    q = x @ wq.T + bq
    k = x @ wk.T + bk
    v = x @ wv.T + bv
    scores = (q @ k.T) / jnp.sqrt(jnp.float32(x.shape[1]))
    return jax.nn.softmax(scores, axis=1) @ v


if __name__ == "__main__":
    def make_inputs(key, S, H):
        kx, kq, kbq, kk_, kbk, kv_, kbv = jax.random.split(key, 7)
        bound = 1.0 / float(H) ** 0.5  # nn.Linear's uniform(-1/sqrt(H), 1/sqrt(H))
        x = jax.random.normal(kx, (S, H), dtype=jnp.float32)
        wq = jax.random.uniform(kq, (H, H), jnp.float32, -bound, bound)
        bq = jax.random.uniform(kbq, (H,), jnp.float32, -bound, bound)
        wk = jax.random.uniform(kk_, (H, H), jnp.float32, -bound, bound)
        bk = jax.random.uniform(kbk, (H,), jnp.float32, -bound, bound)
        wv = jax.random.uniform(kv_, (H, H), jnp.float32, -bound, bound)
        bv = jax.random.uniform(kbv, (H,), jnp.float32, -bound, bound)
        return x, wq, bq, wk, bk, wv, bv

    root = jax.random.PRNGKey(0)
    k1, k2 = jax.random.split(root)

    # Primary shape implied by the module usage: seq=8, hidden=32 (fused path).
    args1 = make_inputs(k1, 8, 32)
    ref1 = _reference(*args1)

    out_default = jax.block_until_ready(self_attention(*args1))  # bf16 MXU default
    assert out_default.shape == (8, 32)
    assert jnp.allclose(out_default, ref1, atol=5e-2, rtol=5e-2)

    out_f32 = jax.block_until_ready(
        self_attention(*args1, compute_dtype=jnp.float32))
    assert jnp.allclose(out_f32, ref1, atol=2e-3, rtol=2e-3)

    # Also exercise the tiled flash path (lane/seq padding + key masking).
    args2 = make_inputs(k2, 100, 64)
    ref2 = _reference(*args2)

    out2 = jax.block_until_ready(self_attention(*args2, force_flash=True))
    assert out2.shape == (100, 64)
    assert jnp.allclose(out2, ref2, atol=5e-2, rtol=5e-2)

    out2_f32 = jax.block_until_ready(
        self_attention(*args2, compute_dtype=jnp.float32, force_flash=True))
    assert jnp.allclose(out2_f32, ref2, atol=2e-3, rtol=2e-3)

    print("KERNEL_OK")
</pallas_src>

<mosaic_0001>
module attributes {stable_mosaic.version = 11 : i64} {
  func.func @fused_attn_kernel(%arg0: i32, %arg1: memref<8x128xbf16, #tpu.memory_space<vmem>>, %arg2: memref<128x128xbf16, #tpu.memory_space<vmem>>, %arg3: memref<128x128xbf16, #tpu.memory_space<vmem>>, %arg4: memref<128x128xbf16, #tpu.memory_space<vmem>>, %arg5: memref<1x128xf32, #tpu.memory_space<vmem>>, %arg6: memref<1x128xf32, #tpu.memory_space<vmem>>, %arg7: memref<1x128xf32, #tpu.memory_space<vmem>>, %arg8: memref<8x128xf32, #tpu.memory_space<vmem>>) attributes {dimension_semantics = [#tpu.dimension_semantics<arbitrary>], iteration_bounds = array<i64: 1>, scalar_prefetch = 0 : i64, scratch_operands = 0 : i64, tpu.core_type = #tpu.core_type<tc>, window_params = [{pipeline_mode = #tpu.pipeline_mode<synchronous>, transform_indices = @transform_0, window_bounds = array<i64: 8, 128>}, {pipeline_mode = #tpu.pipeline_mode<synchronous>, transform_indices = @transform_1, window_bounds = array<i64: 128, 128>}, {pipeline_mode = #tpu.pipeline_mode<synchronous>, transform_indices = @transform_2, window_bounds = array<i64: 128, 128>}, {pipeline_mode = #tpu.pipeline_mode<synchronous>, transform_indices = @transform_3, window_bounds = array<i64: 128, 128>}, {pipeline_mode = #tpu.pipeline_mode<synchronous>, transform_indices = @transform_4, window_bounds = array<i64: 1, 128>}, {pipeline_mode = #tpu.pipeline_mode<synchronous>, transform_indices = @transform_5, window_bounds = array<i64: 1, 128>}, {pipeline_mode = #tpu.pipeline_mode<synchronous>, transform_indices = @transform_6, window_bounds = array<i64: 1, 128>}, {pipeline_mode = #tpu.pipeline_mode<synchronous>, transform_indices = @transform_7, window_bounds = array<i64: 8, 128>}]} {
    %c0 = arith.constant 0 : index
    %c0_0 = arith.constant 0 : index
    %0 = vector.load %arg1[%c0, %c0_0] : memref<8x128xbf16, #tpu.memory_space<vmem>>, vector<8x128xbf16>
    %c0_1 = arith.constant 0 : index
    %c0_2 = arith.constant 0 : index
    %1 = vector.load %arg2[%c0_1, %c0_2] : memref<128x128xbf16, #tpu.memory_space<vmem>>, vector<128x128xbf16>
    %cst = arith.constant dense<0.000000e+00> : vector<8x128xf32>
    %2 = tpu.matmul %0, %1, %cst {dimension_numbers = #tpu.dot_dimension_numbers<[1], [0], [0], [1], [0, 0, 1, 1], [], []>} : vector<8x128xbf16>, vector<128x128xbf16>, vector<8x128xf32> -> vector<8x128xf32>
    %c0_3 = arith.constant 0 : index
    %c0_4 = arith.constant 0 : index
    %3 = vector.load %arg5[%c0_3, %c0_4] : memref<1x128xf32, #tpu.memory_space<vmem>>, vector<1x128xf32>
    %4 = vector.broadcast %3 : vector<1x128xf32> to vector<8x128xf32>
    %5 = arith.addf %2, %4 : vector<8x128xf32>
    %c0_5 = arith.constant 0 : index
    %c0_6 = arith.constant 0 : index
    %6 = vector.load %arg3[%c0_5, %c0_6] : memref<128x128xbf16, #tpu.memory_space<vmem>>, vector<128x128xbf16>
    %cst_7 = arith.constant dense<0.000000e+00> : vector<8x128xf32>
    %7 = tpu.matmul %0, %6, %cst_7 {dimension_numbers = #tpu.dot_dimension_numbers<[1], [0], [0], [1], [0, 0, 1, 1], [], []>} : vector<8x128xbf16>, vector<128x128xbf16>, vector<8x128xf32> -> vector<8x128xf32>
    %c0_8 = arith.constant 0 : index
    %c0_9 = arith.constant 0 : index
    %8 = vector.load %arg6[%c0_8, %c0_9] : memref<1x128xf32, #tpu.memory_space<vmem>>, vector<1x128xf32>
    %9 = vector.broadcast %8 : vector<1x128xf32> to vector<8x128xf32>
    %10 = arith.addf %7, %9 : vector<8x128xf32>
    %c0_10 = arith.constant 0 : index
    %c0_11 = arith.constant 0 : index
    %11 = vector.load %arg4[%c0_10, %c0_11] : memref<128x128xbf16, #tpu.memory_space<vmem>>, vector<128x128xbf16>
    %cst_12 = arith.constant dense<0.000000e+00> : vector<8x128xf32>
    %12 = tpu.matmul %0, %11, %cst_12 {dimension_numbers = #tpu.dot_dimension_numbers<[1], [0], [0], [1], [0, 0, 1, 1], [], []>} : vector<8x128xbf16>, vector<128x128xbf16>, vector<8x128xf32> -> vector<8x128xf32>
    %c0_13 = arith.constant 0 : index
    %c0_14 = arith.constant 0 : index
    %13 = vector.load %arg7[%c0_13, %c0_14] : memref<1x128xf32, #tpu.memory_space<vmem>>, vector<1x128xf32>
    %14 = vector.broadcast %13 : vector<1x128xf32> to vector<8x128xf32>
    %15 = arith.addf %12, %14 : vector<8x128xf32>
    %16 = arith.truncf %5 : vector<8x128xf32> to vector<8x128xbf16>
    %17 = arith.truncf %10 : vector<8x128xf32> to vector<8x128xbf16>
    %cst_15 = arith.constant dense<0.000000e+00> : vector<8x8xf32>
    %18 = tpu.matmul %16, %17, %cst_15 {dimension_numbers = #tpu.dot_dimension_numbers<[1], [1], [0], [0], [0, 0, 1, 0], [], []>} : vector<8x128xbf16>, vector<8x128xbf16>, vector<8x8xf32> -> vector<8x8xf32>
    %cst_16 = arith.constant dense<0xFF800000> : vector<8xf32>
    %19 = vector.multi_reduction <maximumf>, %18, %cst_16 [1] : vector<8x8xf32> to vector<8xf32>
    %20 = vector.shape_cast %19 : vector<8xf32> to vector<8x1xf32>
    %21 = vector.broadcast %20 : vector<8x1xf32> to vector<8x8xf32>
    %22 = arith.subf %18, %21 : vector<8x8xf32>
    %23 = math.exp %22 : vector<8x8xf32>
    %cst_17 = arith.constant dense<0.000000e+00> : vector<8xf32>
    %24 = vector.multi_reduction <add>, %23, %cst_17 [1] : vector<8x8xf32> to vector<8xf32>
    %25 = vector.shape_cast %24 : vector<8xf32> to vector<8x1xf32>
    %26 = arith.truncf %23 : vector<8x8xf32> to vector<8x8xbf16>
    %27 = arith.truncf %15 : vector<8x128xf32> to vector<8x128xbf16>
    %cst_18 = arith.constant dense<0.000000e+00> : vector<8x128xf32>
    %28 = tpu.matmul %26, %27, %cst_18 {dimension_numbers = #tpu.dot_dimension_numbers<[1], [0], [0], [1], [0, 0, 1, 1], [], []>} : vector<8x8xbf16>, vector<8x128xbf16>, vector<8x128xf32> -> vector<8x128xf32>
    %29 = vector.broadcast %25 : vector<8x1xf32> to vector<8x128xf32>
    %30 = arith.divf %28, %29 : vector<8x128xf32>
    %c0_19 = arith.constant 0 : index
    %c0_20 = arith.constant 0 : index
    %31 = vector.load %arg8[%c0_19, %c0_20] : memref<8x128xf32, #tpu.memory_space<vmem>>, vector<8x128xf32>
    tpu.vector_store %arg8[%c0_19, %c0_20], %30 {strides = array<i32>} : memref<8x128xf32, #tpu.memory_space<vmem>>, vector<8x128xf32>,
    return
  }
  func.func @transform_0(%arg0: i32) -> (i32, i32) {
    %c0_i32 = arith.constant 0 : i32
    %c0_i32_0 = arith.constant 0 : i32
    %c0_i32_1 = arith.constant 0 : i32
    return %c0_i32, %c0_i32_0 : i32, i32
  }
  func.func @transform_1(%arg0: i32) -> (i32, i32) {
    %c0_i32 = arith.constant 0 : i32
    %c0_i32_0 = arith.constant 0 : i32
    %c0_i32_1 = arith.constant 0 : i32
    return %c0_i32, %c0_i32_0 : i32, i32
  }
  func.func @transform_2(%arg0: i32) -> (i32, i32) {
    %c0_i32 = arith.constant 0 : i32
    %c0_i32_0 = arith.constant 0 : i32
    %c0_i32_1 = arith.constant 0 : i32
    return %c0_i32, %c0_i32_0 : i32, i32
  }
  func.func @transform_3(%arg0: i32) -> (i32, i32) {
    %c0_i32 = arith.constant 0 : i32
    %c0_i32_0 = arith.constant 0 : i32
    %c0_i32_1 = arith.constant 0 : i32
    return %c0_i32, %c0_i32_0 : i32, i32
  }
  func.func @transform_4(%arg0: i32) -> (i32, i32) {
    %c0_i32 = arith.constant 0 : i32
    %c0_i32_0 = arith.constant 0 : i32
    %c0_i32_1 = arith.constant 0 : i32
    return %c0_i32, %c0_i32_0 : i32, i32
  }
  func.func @transform_5(%arg0: i32) -> (i32, i32) {
    %c0_i32 = arith.constant 0 : i32
    %c0_i32_0 = arith.constant 0 : i32
    %c0_i32_1 = arith.constant 0 : i32
    return %c0_i32, %c0_i32_0 : i32, i32
  }
  func.func @transform_6(%arg0: i32) -> (i32, i32) {
    %c0_i32 = arith.constant 0 : i32
    %c0_i32_0 = arith.constant 0 : i32
    %c0_i32_1 = arith.constant 0 : i32
    return %c0_i32, %c0_i32_0 : i32, i32
  }
  func.func @transform_7(%arg0: i32) -> (i32, i32) {
    %c0_i32 = arith.constant 0 : i32
    %c0_i32_0 = arith.constant 0 : i32
    %c0_i32_1 = arith.constant 0 : i32
    return %c0_i32, %c0_i32_0 : i32, i32
  }
}

</mosaic_0001>

<llo_original>
// kernel: tpu_custom_call.1
$region0: #{tpu_custom_call.1}
  #allocation0 [shape = 'u32[]', space=smem, size = 0x4, offset = 0x4, fixed_abs, tag = 'smem constant byte address 0x4 - core index']
  #allocation1 [shape = 'u32[144,128]{1,0:T(1,128)}', space=vmem, size = 0x12000, scoped, tag = 'internal scratch']
  %s0 = inlined_call_operand.hbm [shape: bf16[8,128], index: 0, kind: input, shape index: {}]
  %s1 = inlined_call_operand.hbm [shape: bf16[128,128], index: 1, kind: input, shape index: {}]
  %s2 = inlined_call_operand.hbm [shape: bf16[128,128], index: 2, kind: input, shape index: {}]
  %s3 = inlined_call_operand.hbm [shape: bf16[128,128], index: 3, kind: input, shape index: {}]
  %s4 = inlined_call_operand.vmem [shape: f32[1,128], index: 4, kind: input, shape index: {}]
  %s5 = inlined_call_operand.vmem [shape: f32[1,128], index: 5, kind: input, shape index: {}]
  %s6 = inlined_call_operand.vmem [shape: f32[1,128], index: 6, kind: input, shape index: {}]
  %s7 = inlined_call_operand.hbm [shape: f32[8,128], index: 7, kind: output, shape index: {}]
  %s8 = sld [smem:[#allocation0]]
  $region54: #{tpu_custom_call.1} parent=0
    _
  %s10 = ssub.s32 1, %s8
  %s11 = scalar_select 0, %s10, %s8
  $region1: #{tpu_custom_call.1} parent=0
    #allocation2 [shape = 'u8[2048]{0}', space=vmem, size = 0x800, scoped, tag = 'input window, operand 0, single buffered']
    #allocation3 [shape = 's32[1]{0}', space=sflag, size = 0x4, scoped, tag = 'scoped memory for tpu_custom_call.1']
    #allocation4 [shape = 's32[1]{0}', space=sflag, size = 0x4, scoped, tag = 'scoped memory for tpu_custom_call.1']
    #allocation5 [shape = 'u8[32768]{0}', space=vmem, size = 0x8000, scoped, tag = 'input window, operand 1, single buffered']
    #allocation6 [shape = 's32[1]{0}', space=sflag, size = 0x4, scoped, tag = 'scoped memory for tpu_custom_call.1']
    #allocation7 [shape = 'u8[32768]{0}', space=vmem, size = 0x8000, scoped, tag = 'input window, operand 2, single buffered']
    #allocation8 [shape = 'u8[32768]{0}', space=vmem, size = 0x8000, scoped, tag = 'input window, operand 3, single buffered']
    #allocation9 [shape = 's32[1]{0}', space=sflag, size = 0x4, scoped, tag = 'scoped memory for tpu_custom_call.1']
    #allocation10 [shape = 'u8[4096]{0}', space=vmem, size = 0x1000, scoped, tag = 'output window, operand 0, single buffered']
    %12 = vsyncpa [#allocation3], 0
    %13 = vsyncpa [#allocation6], 0
    %14 = vsyncpa [#allocation9], 0
    %15 = vsyncpa [#allocation4], 0
    // Predicated region
    $region2: #{tpu_custom_call.1} parent=1 // pred_check
      _
    $region3: #{tpu_custom_call.1} parent=1 // pred_check_branch
      %17 = sbr.rel (0) target = $region5
    $region4: #{tpu_custom_call.1} parent=1 // pred_region
      %s19 = ssub.s32 64, 64
      %20 = vsyncadd [#allocation3], %s19
      %s22 = sshll.u32 [#allocation2], 4
      %s23 = int_to_ptr.vmem [resolvable:$true] %s22
      %25 = dma.hbm_to_vmem [thread:$0]  %s0, 64, %s23, [#allocation3]
    $region5: #{tpu_custom_call.1} parent=1 // pred_fallthru
      _
    // Predicated region
    $region6: #{tpu_custom_call.1} parent=1 // pred_check
      _
    $region7: #{tpu_custom_call.1} parent=1 // pred_check_branch
      %27 = sbr.rel (0) target = $region9
    $region8: #{tpu_custom_call.1} parent=1 // pred_region
      %s29 = ssub.s32 1024, 1024
      %30 = vsyncadd [#allocation6], %s29
      %s31 = sshll.u32 [#allocation5], 4
      %s32 = int_to_ptr.vmem [resolvable:$true] %s31
      %37 = dma.hbm_to_vmem [thread:$0]  %s1, 1024, %s32, [#allocation6], 64, 64, 4
    $region9: #{tpu_custom_call.1} parent=1 // pred_fallthru
      _
    // Predicated region
    $region10: #{tpu_custom_call.1} parent=1 // pred_check
      _
    $region11: #{tpu_custom_call.1} parent=1 // pred_check_branch
      %39 = sbr.rel (0) target = $region13
    $region12: #{tpu_custom_call.1} parent=1 // pred_region
      %s41 = ssub.s32 1024, 1024
      %42 = vsyncadd [#allocation6], %s41
      %s43 = sshll.u32 [#allocation7], 4
      %s44 = int_to_ptr.vmem [resolvable:$true] %s43
      %49 = dma.hbm_to_vmem [thread:$0]  %s2, 1024, %s44, [#allocation6], 64, 64, 4
    $region13: #{tpu_custom_call.1} parent=1 // pred_fallthru
      _
    // Predicated region
    $region14: #{tpu_custom_call.1} parent=1 // pred_check
      _
    $region15: #{tpu_custom_call.1} parent=1 // pred_check_branch
      %51 = sbr.rel (0) target = $region17
    $region16: #{tpu_custom_call.1} parent=1 // pred_region
      %s53 = ssub.s32 1024, 1024
      %54 = vsyncadd [#allocation9], %s53
      %s55 = sshll.u32 [#allocation8], 4
      %s56 = int_to_ptr.vmem [resolvable:$true] %s55
      %61 = dma.hbm_to_vmem [thread:$0]  %s3, 1024, %s56, [#allocation9], 64, 64, 4
    $region17: #{tpu_custom_call.1} parent=1 // pred_fallthru
      _
    // Predicated region
    $region18: #{tpu_custom_call.1} parent=1 // pred_check
      _
    $region19: #{tpu_custom_call.1} parent=1 // pred_check_branch
      %63 = sbr.rel (0) target = $region21
    $region20: #{tpu_custom_call.1} parent=1 // pred_region
      _
    $region21: #{tpu_custom_call.1} parent=1 // pred_fallthru
      _
    // Predicated region
    $region22: #{tpu_custom_call.1} parent=1 // pred_check
      _
    $region23: #{tpu_custom_call.1} parent=1 // pred_check_branch
      %65 = sbr.rel (0) target = $region25
    $region24: #{tpu_custom_call.1} parent=1 // pred_region
      _
    $region25: #{tpu_custom_call.1} parent=1 // pred_fallthru
      _
    // Predicated region
    $region26: #{tpu_custom_call.1} parent=1 // pred_check
      _
    $region27: #{tpu_custom_call.1} parent=1 // pred_check_branch
      %67 = sbr.rel (0) target = $region29
    $region28: #{tpu_custom_call.1} parent=1 // pred_region
      _
    $region29: #{tpu_custom_call.1} parent=1 // pred_fallthru
      _
    // Predicated region
    $region30: #{tpu_custom_call.1} parent=1 // pred_check
      _
    $region31: #{tpu_custom_call.1} parent=1 // pred_check_branch
      %69 = sbr.rel (0) target = $region33
    $region32: #{tpu_custom_call.1} parent=1 // pred_region
      %70 = dma.done [#allocation3], 64
    $region33: #{tpu_custom_call.1} parent=1 // pred_fallthru
      _
    // Predicated region
    $region34: #{tpu_custom_call.1} parent=1 // pred_check
      _
    $region35: #{tpu_custom_call.1} parent=1 // pred_check_branch
      %72 = sbr.rel (0) target = $region37
    $region36: #{tpu_custom_call.1} parent=1 // pred_region
      %73 = dma.done [#allocation6], 1024
    $region37: #{tpu_custom_call.1} parent=1 // pred_fallthru
      _
    // Predicated region
    $region38: #{tpu_custom_call.1} parent=1 // pred_check
      _
    $region39: #{tpu_custom_call.1} parent=1 // pred_check_branch
      %75 = sbr.rel (0) target = $region41
    $region40: #{tpu_custom_call.1} parent=1 // pred_region
      %76 = dma.done [#allocation6], 1024
    $region41: #{tpu_custom_call.1} parent=1 // pred_fallthru
      _
    // Predicated region
    $region42: #{tpu_custom_call.1} parent=1 // pred_check
      _
    $region43: #{tpu_custom_call.1} parent=1 // pred_check_branch
      %78 = sbr.rel (0) target = $region45
    $region44: #{tpu_custom_call.1} parent=1 // pred_region
      %79 = dma.done [#allocation9], 1024
    $region45: #{tpu_custom_call.1} parent=1 // pred_fallthru
      _
    %v81 = vld [vmem:[#allocation2] sm:$0xf]
    %v82 = vld [vmem:[#allocation5] sm:$0xf]
    %v83 = vld [vmem:[#allocation5 + $0x4] sm:$0xf]
    %v84 = vld [vmem:[#allocation5 + $0x8] sm:$0xf]
    %v85 = vld [vmem:[#allocation5 + $0xc] sm:$0xf]
    %v86 = vld [vmem:[#allocation5 + $0x10] sm:$0xf]
    %v87 = vld [vmem:[#allocation5 + $0x14] sm:$0xf]
    %v88 = vld [vmem:[#allocation5 + $0x18] sm:$0xf]
    %v89 = vld [vmem:[#allocation5 + $0x1c] sm:$0xf]
    %v90 = vld [vmem:[#allocation5 + $0x20] sm:$0xf]
    %v91 = vld [vmem:[#allocation5 + $0x24] sm:$0xf]
    %v92 = vld [vmem:[#allocation5 + $0x28] sm:$0xf]
    %v93 = vld [vmem:[#allocation5 + $0x2c] sm:$0xf]
    %v94 = vld [vmem:[#allocation5 + $0x30] sm:$0xf]
    %v95 = vld [vmem:[#allocation5 + $0x34] sm:$0xf]
    %v96 = vld [vmem:[#allocation5 + $0x38] sm:$0xf]
    %v97 = vld [vmem:[#allocation5 + $0x3c] sm:$0xf]
    %v98 = vld [vmem:[%s4] sm:$0x1]
    %v100 = vlaneseq
    %v101 = vshrl.u32 %v100, 7
    %v102 = vsub.s32 0, %v101
    %v103 = vrot.slane %v98, %v102
    %v121 = vunpack.c.l.b16 %v82
    %v122 = vunpack.c.l.b16 %v83
    %v123 = vunpack.c.l.b16 %v84
    %v124 = vunpack.c.l.b16 %v85
    %v125 = vunpack.c.l.b16 %v86
    %v126 = vunpack.c.l.b16 %v87
    %v127 = vunpack.c.l.b16 %v88
    %v128 = vunpack.c.l.b16 %v89
    %v129 = vunpack.c.l.b16 %v90
    %v130 = vunpack.c.l.b16 %v91
    %v131 = vunpack.c.l.b16 %v92
    %v132 = vunpack.c.l.b16 %v93
    %v133 = vunpack.c.l.b16 %v94
    %v134 = vunpack.c.l.b16 %v95
    %v135 = vunpack.c.l.b16 %v96
    %v136 = vunpack.c.l.b16 %v97
    %v137 = vpack.c.b16 %v122, %v121
    %v138 = vpack.c.b16 %v124, %v123
    %v139 = vpack.c.b16 %v126, %v125
    %v140 = vpack.c.b16 %v128, %v127
    %v141 = vpack.c.b16 %v130, %v129
    %v142 = vpack.c.b16 %v132, %v131
    %v143 = vpack.c.b16 %v134, %v133
    %v144 = vpack.c.b16 %v136, %v135
    %153 = vmatprep.subr.bf16.mxu0 0
    %154 = vmatpush1.bf16.msra.mxu0 %v137
    %155 = vmatprep.subr.bf16.mxu0 0
    %156 = vmatpush1.bf16.msra.mxu0 %v138
    %157 = vmatprep.subr.bf16.mxu0 0
    %158 = vmatpush1.bf16.msra.mxu0 %v139
    %159 = vmatprep.subr.bf16.mxu0 0
    %160 = vmatpush1.bf16.msra.mxu0 %v140
    %161 = vmatprep.subr.bf16.mxu0 0
    %162 = vmatpush1.bf16.msra.mxu0 %v141
    %163 = vmatprep.subr.bf16.mxu0 0
    %164 = vmatpush1.bf16.msra.mxu0 %v142
    %165 = vmatprep.subr.bf16.mxu0 0
    %166 = vmatpush1.bf16.msra.mxu0 %v143
    %167 = vmatprep.subr.bf16.mxu0 0
    %168 = vmatpush1.bf16.msra.mxu0 %v144
    %169 = vmatprep.subr.bf16.mxu0 0
    %170 = vmatpush1.bf16.msra.mxu0 0
    %171 = vmatprep.subr.bf16.mxu0 0
    %172 = vmatpush1.bf16.msra.mxu0 0
    %173 = vmatprep.subr.bf16.mxu0 0
    %174 = vmatpush1.bf16.msra.mxu0 0
    %175 = vmatprep.subr.bf16.mxu0 0
    %176 = vmatpush1.bf16.msra.mxu0 0
    %177 = vmatprep.subr.bf16.mxu0 0
    %178 = vmatpush1.bf16.msra.mxu0 0
    %179 = vmatprep.subr.bf16.mxu0 0
    %180 = vmatpush1.bf16.msra.mxu0 0
    %181 = vmatprep.subr.bf16.mxu0 0
    %182 = vmatpush1.bf16.msra.mxu0 0
    %183 = vmatprep.subr.bf16.mxu0 0
    %184 = vmatpush1.bf16.msra.mxu0 0
    %185 = vmatprep.mubr.bf16.mxu0 0
    %186 = vmatmul.mubr.bf16.gmra.mrb[0].mxu0 %v81
    %v187 = vpop.f32.mrb[0].mxu0
    %v188 = vadd.f32 %v103, %v187
    %v189 = vpop.f32.mrb[0].mxu0
    %v190 = vpop.f32.mrb[0].mxu0
    %v191 = vpop.f32.mrb[0].mxu0
    %192 = vdwg.mxu0
    %v193 = vld [vmem:[#allocation7] sm:$0xf]
    %v194 = vld [vmem:[#allocation7 + $0x4] sm:$0xf]
    %v195 = vld [vmem:[#allocation7 + $0x8] sm:$0xf]
    %v196 = vld [vmem:[#allocation7 + $0xc] sm:$0xf]
    %v197 = vld [vmem:[#allocation7 + $0x10] sm:$0xf]
    %v198 = vld [vmem:[#allocation7 + $0x14] sm:$0xf]
    %v199 = vld [vmem:[#allocation7 + $0x18] sm:$0xf]
    %v200 = vld [vmem:[#allocation7 + $0x1c] sm:$0xf]
    %v201 = vld [vmem:[#allocation7 + $0x20] sm:$0xf]
    %v202 = vld [vmem:[#allocation7 + $0x24] sm:$0xf]
    %v203 = vld [vmem:[#allocation7 + $0x28] sm:$0xf]
    %v204 = vld [vmem:[#allocation7 + $0x2c] sm:$0xf]
    %v205 = vld [vmem:[#allocation7 + $0x30] sm:$0xf]
    %v206 = vld [vmem:[#allocation7 + $0x34] sm:$0xf]
    %v207 = vld [vmem:[#allocation7 + $0x38] sm:$0xf]
    %v208 = vld [vmem:[#allocation7 + $0x3c] sm:$0xf]
    %v209 = vld [vmem:[%s5] sm:$0x1]
    %v211 = vlaneseq
    %v212 = vshrl.u32 %v211, 7
    %v213 = vsub.s32 0, %v212
    %v214 = vrot.slane %v209, %v213
    %v232 = vunpack.c.l.b16 %v193
    %v233 = vunpack.c.l.b16 %v194
    %v234 = vunpack.c.l.b16 %v195
    %v235 = vunpack.c.l.b16 %v196
    %v236 = vunpack.c.l.b16 %v197
    %v237 = vunpack.c.l.b16 %v198
    %v238 = vunpack.c.l.b16 %v199
    %v239 = vunpack.c.l.b16 %v200
    %v240 = vunpack.c.l.b16 %v201
    %v241 = vunpack.c.l.b16 %v202
    %v242 = vunpack.c.l.b16 %v203
    %v243 = vunpack.c.l.b16 %v204
    %v244 = vunpack.c.l.b16 %v205
    %v245 = vunpack.c.l.b16 %v206
    %v246 = vunpack.c.l.b16 %v207
    %v247 = vunpack.c.l.b16 %v208
    %v248 = vpack.c.b16 %v233, %v232
    %v249 = vpack.c.b16 %v235, %v234
    %v250 = vpack.c.b16 %v237, %v236
    %v251 = vpack.c.b16 %v239, %v238
    %v252 = vpack.c.b16 %v241, %v240
    %v253 = vpack.c.b16 %v243, %v242
    %v254 = vpack.c.b16 %v245, %v244
    %v255 = vpack.c.b16 %v247, %v246
    %264 = vmatprep.subr.bf16.mxu0 0
    %265 = vmatpush1.bf16.msra.mxu0 %v248
    %266 = vmatprep.subr.bf16.mxu0 0
    %267 = vmatpush1.bf16.msra.mxu0 %v249
    %268 = vmatprep.subr.bf16.mxu0 0
    %269 = vmatpush1.bf16.msra.mxu0 %v250
    %270 = vmatprep.subr.bf16.mxu0 0
    %271 = vmatpush1.bf16.msra.mxu0 %v251
    %272 = vmatprep.subr.bf16.mxu0 0
    %273 = vmatpush1.bf16.msra.mxu0 %v252
    %274 = vmatprep.subr.bf16.mxu0 0
    %275 = vmatpush1.bf16.msra.mxu0 %v253
    %276 = vmatprep.subr.bf16.mxu0 0
    %277 = vmatpush1.bf16.msra.mxu0 %v254
    %278 = vmatprep.subr.bf16.mxu0 0
    %279 = vmatpush1.bf16.msra.mxu0 %v255
    %280 = vmatprep.subr.bf16.mxu0 0
    %281 = vmatpush1.bf16.msra.mxu0 0
    %282 = vmatprep.subr.bf16.mxu0 0
    %283 = vmatpush1.bf16.msra.mxu0 0
    %284 = vmatprep.subr.bf16.mxu0 0
    %285 = vmatpush1.bf16.msra.mxu0 0
    %286 = vmatprep.subr.bf16.mxu0 0
    %287 = vmatpush1.bf16.msra.mxu0 0
    %288 = vmatprep.subr.bf16.mxu0 0
    %289 = vmatpush1.bf16.msra.mxu0 0
    %290 = vmatprep.subr.bf16.mxu0 0
    %291 = vmatpush1.bf16.msra.mxu0 0
    %292 = vmatprep.subr.bf16.mxu0 0
    %293 = vmatpush1.bf16.msra.mxu0 0
    %294 = vmatprep.subr.bf16.mxu0 0
    %295 = vmatpush1.bf16.msra.mxu0 0
    %296 = vmatprep.mubr.bf16.mxu0 0
    %297 = vmatmul.mubr.bf16.gmra.mrb[0].mxu0 %v81
    %v298 = vpop.f32.mrb[0].mxu0
    %v299 = vadd.f32 %v214, %v298
    %v300 = vpop.f32.mrb[0].mxu0
    %v301 = vpop.f32.mrb[0].mxu0
    %v302 = vpop.f32.mrb[0].mxu0
    %303 = vdwg.mxu0
    %v304 = vld [vmem:[#allocation8] sm:$0xf]
    %v305 = vld [vmem:[#allocation8 + $0x4] sm:$0xf]
    %v306 = vld [vmem:[#allocation8 + $0x8] sm:$0xf]
    %v307 = vld [vmem:[#allocation8 + $0xc] sm:$0xf]
    %v308 = vld [vmem:[#allocation8 + $0x10] sm:$0xf]
    %v309 = vld [vmem:[#allocation8 + $0x14] sm:$0xf]
    %v310 = vld [vmem:[#allocation8 + $0x18] sm:$0xf]
    %v311 = vld [vmem:[#allocation8 + $0x1c] sm:$0xf]
    %v312 = vld [vmem:[#allocation8 + $0x20] sm:$0xf]
    %v313 = vld [vmem:[#allocation8 + $0x24] sm:$0xf]
    %v314 = vld [vmem:[#allocation8 + $0x28] sm:$0xf]
    %v315 = vld [vmem:[#allocation8 + $0x2c] sm:$0xf]
    %v316 = vld [vmem:[#allocation8 + $0x30] sm:$0xf]
    %v317 = vld [vmem:[#allocation8 + $0x34] sm:$0xf]
    %v318 = vld [vmem:[#allocation8 + $0x38] sm:$0xf]
    %v319 = vld [vmem:[#allocation8 + $0x3c] sm:$0xf]
    %v320 = vld [vmem:[%s6] sm:$0x1]
    %v322 = vlaneseq
    %v323 = vshrl.u32 %v322, 7
    %v324 = vsub.s32 0, %v323
    %v325 = vrot.slane %v320, %v324
    %v343 = vunpack.c.l.b16 %v304
    %v344 = vunpack.c.l.b16 %v305
    %v345 = vunpack.c.l.b16 %v306
    %v346 = vunpack.c.l.b16 %v307
    %v347 = vunpack.c.l.b16 %v308
    %v348 = vunpack.c.l.b16 %v309
    %v349 = vunpack.c.l.b16 %v310
    %v350 = vunpack.c.l.b16 %v311
    %v351 = vunpack.c.l.b16 %v312
    %v352 = vunpack.c.l.b16 %v313
    %v353 = vunpack.c.l.b16 %v314
    %v354 = vunpack.c.l.b16 %v315
    %v355 = vunpack.c.l.b16 %v316
    %v356 = vunpack.c.l.b16 %v317
    %v357 = vunpack.c.l.b16 %v318
    %v358 = vunpack.c.l.b16 %v319
    %v359 = vpack.c.b16 %v344, %v343
    %v360 = vpack.c.b16 %v346, %v345
    %v361 = vpack.c.b16 %v348, %v347
    %v362 = vpack.c.b16 %v350, %v349
    %v363 = vpack.c.b16 %v352, %v351
    %v364 = vpack.c.b16 %v354, %v353
    %v365 = vpack.c.b16 %v356, %v355
    %v366 = vpack.c.b16 %v358, %v357
    %375 = vmatprep.subr.bf16.mxu0 0
    %376 = vmatpush1.bf16.msra.mxu0 %v359
    %377 = vmatprep.subr.bf16.mxu0 0
    %378 = vmatpush1.bf16.msra.mxu0 %v360
    %379 = vmatprep.subr.bf16.mxu0 0
    %380 = vmatpush1.bf16.msra.mxu0 %v361
    %381 = vmatprep.subr.bf16.mxu0 0
    %382 = vmatpush1.bf16.msra.mxu0 %v362
    %383 = vmatprep.subr.bf16.mxu0 0
    %384 = vmatpush1.bf16.msra.mxu0 %v363
    %385 = vmatprep.subr.bf16.mxu0 0
    %386 = vmatpush1.bf16.msra.mxu0 %v364
    %387 = vmatprep.subr.bf16.mxu0 0
    %388 = vmatpush1.bf16.msra.mxu0 %v365
    %389 = vmatprep.subr.bf16.mxu0 0
    %390 = vmatpush1.bf16.msra.mxu0 %v366
    %391 = vmatprep.subr.bf16.mxu0 0
    %392 = vmatpush1.bf16.msra.mxu0 0
    %393 = vmatprep.subr.bf16.mxu0 0
    %394 = vmatpush1.bf16.msra.mxu0 0
    %395 = vmatprep.subr.bf16.mxu0 0
    %396 = vmatpush1.bf16.msra.mxu0 0
    %397 = vmatprep.subr.bf16.mxu0 0
    %398 = vmatpush1.bf16.msra.mxu0 0
    %399 = vmatprep.subr.bf16.mxu0 0
    %400 = vmatpush1.bf16.msra.mxu0 0
    %401 = vmatprep.subr.bf16.mxu0 0
    %402 = vmatpush1.bf16.msra.mxu0 0
    %403 = vmatprep.subr.bf16.mxu0 0
    %404 = vmatpush1.bf16.msra.mxu0 0
    %405 = vmatprep.subr.bf16.mxu0 0
    %406 = vmatpush1.bf16.msra.mxu0 0
    %407 = vmatprep.mubr.bf16.mxu0 0
    %408 = vmatmul.mubr.bf16.gmra.mrb[0].mxu0 %v81
    %v409 = vpop.f32.mrb[0].mxu0
    %v410 = vadd.f32 %v325, %v409
    %v411 = vpop.f32.mrb[0].mxu0
    %v412 = vpop.f32.mrb[0].mxu0
    %v413 = vpop.f32.mrb[0].mxu0
    %414 = vdwg.mxu0
    %v415 = vpack.c.bf16 %v188, %v188
    %v416 = vpack.c.bf16 %v299, %v299
    %417 = vmatprep.subr.bf16.mxu0 0
    %418 = vmatpush1.bf16.xpose.msra.mxu0 %v416
    %419 = vmatprep.subr.bf16.mxu0 0
    %420 = vmatpush1.bf16.xpose.msra.mxu0 0
    %421 = vmatprep.subr.bf16.mxu0 0
    %422 = vmatpush1.bf16.xpose.msra.mxu0 0
    %423 = vmatprep.subr.bf16.mxu0 0
    %424 = vmatpush1.bf16.xpose.msra.mxu0 0
    %425 = vmatprep.subr.bf16.mxu0 0
    %426 = vmatpush1.bf16.xpose.msra.mxu0 0
    %427 = vmatprep.subr.bf16.mxu0 0
    %428 = vmatpush1.bf16.xpose.msra.mxu0 0
    %429 = vmatprep.subr.bf16.mxu0 0
    %430 = vmatpush1.bf16.xpose.msra.mxu0 0
    %431 = vmatprep.subr.bf16.mxu0 0
    %432 = vmatpush1.bf16.xpose.msra.mxu0 0
    %433 = vmatprep.subr.bf16.mxu0 0
    %434 = vmatpush1.bf16.xpose.msra.mxu0 0
    %435 = vmatprep.subr.bf16.mxu0 0
    %436 = vmatpush1.bf16.xpose.msra.mxu0 0
    %437 = vmatprep.subr.bf16.mxu0 0
    %438 = vmatpush1.bf16.xpose.msra.mxu0 0
    %439 = vmatprep.subr.bf16.mxu0 0
    %440 = vmatpush1.bf16.xpose.msra.mxu0 0
    %441 = vmatprep.subr.bf16.mxu0 0
    %442 = vmatpush1.bf16.xpose.msra.mxu0 0
    %443 = vmatprep.subr.bf16.mxu0 0
    %444 = vmatpush1.bf16.xpose.msra.mxu0 0
    %445 = vmatprep.subr.bf16.mxu0 0
    %446 = vmatpush1.bf16.xpose.msra.mxu0 0
    %447 = vmatprep.subr.bf16.mxu0 0
    %448 = vmatpush1.bf16.xpose.msra.mxu0 0
    %449 = vmatprep.mubr.bf16.mxu0 0
    %450 = vmatmul.mubr.bf16.gmra.mrb[0].mxu0 %v415
    %v451 = vpop.f32.mrb[0].mxu0
    %v452 = vadd.f32 0.0, %v451
    %v453 = vpop.f32.mrb[0].mxu0
    %v454 = vpop.f32.mrb[0].mxu0
    %v455 = vpop.f32.mrb[0].mxu0
    %456 = vdwg.mxu0
    %vm457 = vcmask 64512
    %v458 = vsel %vm457, %v452, -inf
    %459 = vmax.xlane.f32.xlu0 %v458
    %v460 = vpop.xlane.xlu0 %459
    %v461 = vsub.f32 %v452, %v460
    %v462 = vmul.f32 %v461, 1.442695
    %v463 = vpow.pop %v462
    %v464 = vsel %vm457, %v463, 0.0
    %465 = vadd.xlane.f32.xlu0 %v464
    %v466 = vpop.xlane.xlu0 %465
    %v467 = vpack.c.bf16 %v463, %v463
    %v468 = vpack.c.bf16 %v410, %v410
    %v470 = vsel %vm457, %v467, 0
    %vm472 = vcmask 1043456
    %v474 = vsel %vm472, %v468, 0
    %476 = vmatprep.subr.bf16.mxu0 0
    %477 = vmatpush1.bf16.msra.mxu0 %v474
    %478 = vmatprep.subr.bf16.mxu0 0
    %479 = vmatpush1.bf16.msra.mxu0 0
    %480 = vmatprep.subr.bf16.mxu0 0
    %481 = vmatpush1.bf16.msra.mxu0 0
    %482 = vmatprep.subr.bf16.mxu0 0
    %483 = vmatpush1.bf16.msra.mxu0 0
    %484 = vmatprep.subr.bf16.mxu0 0
    %485 = vmatpush1.bf16.msra.mxu0 0
    %486 = vmatprep.subr.bf16.mxu0 0
    %487 = vmatpush1.bf16.msra.mxu0 0
    %488 = vmatprep.subr.bf16.mxu0 0
    %489 = vmatpush1.bf16.msra.mxu0 0
    %490 = vmatprep.subr.bf16.mxu0 0
    %491 = vmatpush1.bf16.msra.mxu0 0
    %492 = vmatprep.subr.bf16.mxu0 0
    %493 = vmatpush1.bf16.msra.mxu0 0
    %494 = vmatprep.subr.bf16.mxu0 0
    %495 = vmatpush1.bf16.msra.mxu0 0
    %496 = vmatprep.subr.bf16.mxu0 0
    %497 = vmatpush1.bf16.msra.mxu0 0
    %498 = vmatprep.subr.bf16.mxu0 0
    %499 = vmatpush1.bf16.msra.mxu0 0
    %500 = vmatprep.subr.bf16.mxu0 0
    %501 = vmatpush1.bf16.msra.mxu0 0
    %502 = vmatprep.subr.bf16.mxu0 0
    %503 = vmatpush1.bf16.msra.mxu0 0
    %504 = vmatprep.subr.bf16.mxu0 0
    %505 = vmatpush1.bf16.msra.mxu0 0
    %506 = vmatprep.subr.bf16.mxu0 0
    %507 = vmatpush1.bf16.msra.mxu0 0
    %508 = vmatprep.mubr.bf16.mxu0 0
    %509 = vmatmul.mubr.bf16.gmra.mrb[0].mxu0 %v470
    %v510 = vpop.f32.mrb[0].mxu0
    %v511 = vadd.f32 0.0, %v510
    %v512 = vpop.f32.mrb[0].mxu0
    %v513 = vpop.f32.mrb[0].mxu0
    %v514 = vpop.f32.mrb[0].mxu0
    %515 = vdwg.mxu0
    %v516 = vrcp.pop %v466
    %v517 = vmul.f32 %v511, %v516
    %518 = vst [vmem:[#allocation10] sm:$0xff] %v517
    // Predicated region
    $region46: #{tpu_custom_call.1} parent=1 // pred_check
      _
    $region47: #{tpu_custom_call.1} parent=1 // pred_check_branch
      %520 = sbr.rel (0) target = $region49
    $region48: #{tpu_custom_call.1} parent=1 // pred_region
      %s522 = ssub.s32 128, 128
      %523 = vsyncadd [#allocation4], %s522
      %s525 = sshll.u32 [#allocation10], 4
      %s526 = int_to_ptr.vmem [resolvable:$true] %s525
      %528 = dma.vmem_to_hbm [thread:$0]  %s526, 128, %s7, [#allocation4]
    $region49: #{tpu_custom_call.1} parent=1 // pred_fallthru
      _
    // Predicated region
    $region50: #{tpu_custom_call.1} parent=1 // pred_check
      _
    $region51: #{tpu_custom_call.1} parent=1 // pred_check_branch
      %530 = sbr.rel (0) target = $region53
    $region52: #{tpu_custom_call.1} parent=1 // pred_region
      %531 = dma.done [#allocation4], 128
    $region53: #{tpu_custom_call.1} parent=1 // pred_fallthru
      _
    %532 = vsyncpa [#allocation3], 1
    %533 = vsyncpa [#allocation6], 1
    %534 = vsyncpa [#allocation9], 1
    %535 = vsyncpa [#allocation4], 1

</llo_original>
